<compile_context>
chip_gen: v6e
topology: v6e:2x2x1
jax: 0.10.0
libtpu: 0.0.40
codegen_flags: <defaults>
</compile_context>

<pallas_src>
import math

import jax
import jax.numpy as jnp
from jax.experimental import pallas as pl
from jax.experimental.pallas import tpu as pltpu


def _round_up(n: int, mult: int) -> int:
    return ((n + mult - 1) // mult) * mult


# --------------------------------------------------------------------------
# Hoisted row L2 normalization (single mem-bound pass, also casts dtype).
# --------------------------------------------------------------------------
def _l2norm_kernel(x_ref, o_ref):
    x = x_ref[...].astype(jnp.float32)
    ssq = jnp.sum(x * x, axis=-1, keepdims=True)
    # 1 / max(||x||, 1e-12) == rsqrt(max(||x||^2, 1e-24))   (F.normalize eps)
    inv = jax.lax.rsqrt(jnp.maximum(ssq, 1e-24))
    o_ref[...] = (x * inv).astype(o_ref.dtype)


def _l2_normalize_rows(x, *, row_tile: int, out_dtype):
    rows, d = x.shape
    assert rows % row_tile == 0
    cost = pl.CostEstimate(
        flops=3 * rows * d,
        transcendentals=rows,
        bytes_accessed=rows * d * (x.dtype.itemsize + jnp.dtype(out_dtype).itemsize))
    return pl.pallas_call(
        _l2norm_kernel,
        out_shape=jax.ShapeDtypeStruct((rows, d), out_dtype),
        grid_spec=pltpu.PrefetchScalarGridSpec(
            num_scalar_prefetch=0,
            grid=(rows // row_tile,),
            in_specs=[pl.BlockSpec((row_tile, d), lambda i: (i, 0))],
            out_specs=pl.BlockSpec((row_tile, d), lambda i: (i, 0))),
        compiler_params=pltpu.CompilerParams(
            dimension_semantics=("parallel",),
            vmem_limit_bytes=32 * 1024 * 1024),
        cost_estimate=cost,
    )(x)


# --------------------------------------------------------------------------
# Hot kernel: tiled matmul + angular-margin epilogue on the label column.
# --------------------------------------------------------------------------
def _make_margin_kernel(m: int, s: float, clip_eps: float = 1e-7):
    def kernel(xn_ref, wn_ref, y_ref, o_ref):
        xn = xn_ref[...]                     # [TB, D] (f32 or bf16), pre-normalized
        wn = wn_ref[...]                     # [TC, D]
        y = y_ref[...]                       # [TB, 1] int32 global class labels

        # logits = xn @ wn.T without materializing a transpose: contract dim 1
        # of both operands; f32 accumulation on the MXU.
        logits = jax.lax.dot_general(
            xn, wn,
            dimension_numbers=(((1,), (1,)), ((), ())),
            preferred_element_type=jnp.float32)          # [TB, TC]

        tb, tc = logits.shape
        col0 = pl.program_id(1) * tc
        col_ids = col0 + jax.lax.broadcasted_iota(jnp.int32, (tb, tc), 1)
        one_hot = col_ids == y                           # [TB, TC] (y broadcasts)

        # Gather the label-column logit per row (0.0 if this C-tile does not
        # contain the label; that result is never selected below).
        t_lab = jnp.sum(jnp.where(one_hot, logits, 0.0), axis=-1, keepdims=True)
        t = jnp.clip(t_lab, -1.0 + clip_eps, 1.0 - clip_eps)

        # cos(m*acos(t)) == Chebyshev polynomial T_m(t) for integer m, applied
        # only to the [TB, 1] label column (not the full tile).
        t_prev = jnp.ones_like(t)   # T_0
        t_cur = t                   # T_1
        if m == 0:
            target = t_prev
        elif m == 1:
            target = t_cur
        else:
            for _ in range(m - 1):
                t_prev, t_cur = t_cur, 2.0 * t * t_cur - t_prev
            target = t_cur

        out = jnp.where(one_hot, target, logits) * jnp.float32(s)
        o_ref[...] = out.astype(o_ref.dtype)

    return kernel


def sphereface_forward(x, W, y, *, m: int, s: float,
                       tb: int = 256, tc: int = 512,
                       compute_dtype=jnp.float32):
    """x: [B, D] f32, W: [C, D] f32, y: [B] int labels -> [B, C] f32 output."""
    B, D = x.shape
    C, Dw = W.shape
    assert D == Dw

    # Tile sizes: TB a multiple of 8 (sublanes), TC a multiple of 128
    # (lane-dense output tile -> unmasked stores). Small problems collapse to
    # a single full-extent tile.
    tb = min(tb, _round_up(B, 8))
    tc = min(tc, _round_up(C, 128))
    B_pad = _round_up(B, tb)
    C_pad = _round_up(C, tc)

    xp = jnp.zeros((B_pad, D), x.dtype).at[:B].set(x)
    Wp = jnp.zeros((C_pad, D), W.dtype).at[:C].set(W)
    yp = jnp.zeros((B_pad, 1), jnp.int32).at[:B, 0].set(y.astype(jnp.int32))

    # Hoisted single-pass normalization (also casts to compute_dtype so the
    # main kernel streams narrower W tiles when bf16 is requested).
    xn = _l2_normalize_rows(xp, row_tile=tb, out_dtype=compute_dtype)
    Wn = _l2_normalize_rows(Wp, row_tile=tc, out_dtype=compute_dtype)

    itemsize = jnp.dtype(compute_dtype).itemsize
    cost = pl.CostEstimate(
        flops=2 * B_pad * C_pad * D,
        transcendentals=0,
        bytes_accessed=(B_pad * D + C_pad * D) * itemsize
        + B_pad * 4 + B_pad * C_pad * 4)

    out = pl.pallas_call(
        _make_margin_kernel(m, s),
        out_shape=jax.ShapeDtypeStruct((B_pad, C_pad), jnp.float32),
        grid_spec=pltpu.PrefetchScalarGridSpec(
            num_scalar_prefetch=0,
            grid=(B_pad // tb, C_pad // tc),
            in_specs=[
                pl.BlockSpec((tb, D), lambda i, j: (i, 0)),   # xn tile
                pl.BlockSpec((tc, D), lambda i, j: (j, 0)),   # Wn tile
                pl.BlockSpec((tb, 1), lambda i, j: (i, 0)),   # labels
            ],
            out_specs=pl.BlockSpec((tb, tc), lambda i, j: (i, j))),
        compiler_params=pltpu.CompilerParams(
            dimension_semantics=("parallel", "parallel"),
            vmem_limit_bytes=32 * 1024 * 1024),
        cost_estimate=cost,
    )(xn, Wn, yp)

    return out[:B, :C]


def sphereface_ref(x, W, y, *, m: int, s: float):
    """Pure-JAX reference matching the PyTorch module exactly."""
    xn = x / jnp.maximum(jnp.linalg.norm(x, axis=1, keepdims=True), 1e-12)
    Wn = W / jnp.maximum(jnp.linalg.norm(W, axis=1, keepdims=True), 1e-12)
    logits = xn @ Wn.T
    theta = jnp.arccos(jnp.clip(logits, -1.0 + 1e-7, 1.0 - 1e-7))
    target = jnp.cos(m * theta)
    one_hot = jax.nn.one_hot(y, logits.shape[1], dtype=logits.dtype)
    return (logits * (1.0 - one_hot) + target * one_hot) * s


if __name__ == "__main__":
    m, s = 4, 30.0
    key = jax.random.PRNGKey(0)
    kx, kw, ky = jax.random.split(key, 3)

    # Small shapes consistent with the module: batch=8, in_features=32,
    # out_features=16 (C is padded to a lane-dense 128 inside the wrapper).
    B, D, C = 8, 32, 16
    x = jax.random.normal(kx, (B, D), dtype=jnp.float32)
    bound = math.sqrt(6.0 / (D + C))          # Xavier-uniform init for W
    W = jax.random.uniform(kw, (C, D), dtype=jnp.float32,
                           minval=-bound, maxval=bound)
    y = jax.random.randint(ky, (B,), 0, C, dtype=jnp.int32)

    out = jax.block_until_ready(sphereface_forward(x, W, y, m=m, s=s))
    ref = sphereface_ref(x, W, y, m=m, s=s)
    assert out.shape == (B, C)
    assert jnp.max(jnp.abs(out - ref)) < 1e-3, "f32 kernel mismatch vs reference"

    # Ragged shapes (exercise zero-padding of B and C to tile multiples).
    B2, D2, C2 = 10, 48, 20
    x2 = jax.random.normal(kx, (B2, D2), dtype=jnp.float32)
    W2 = jax.random.uniform(kw, (C2, D2), dtype=jnp.float32,
                            minval=-0.3, maxval=0.3)
    y2 = jax.random.randint(ky, (B2,), 0, C2, dtype=jnp.int32)
    out2 = jax.block_until_ready(sphereface_forward(x2, W2, y2, m=m, s=s))
    ref2 = sphereface_ref(x2, W2, y2, m=m, s=s)
    assert out2.shape == (B2, C2)
    assert jnp.max(jnp.abs(out2 - ref2)) < 1e-3, "ragged kernel mismatch"

    # bf16 MXU-input fast path (v6e/v7x), f32 accumulation: looser tolerance.
    out_bf16 = jax.block_until_ready(
        sphereface_forward(x, W, y, m=m, s=s, compute_dtype=jnp.bfloat16))
    assert jnp.max(jnp.abs(out_bf16 - ref)) < 1.0, "bf16 kernel diverged"

    print("KERNEL_OK")
</pallas_src>

<mosaic_0001>
module attributes {stable_mosaic.version = 11 : i64} {
  func.func @_l2norm_kernel(%arg0: i32, %arg1: memref<8x32xf32, #tpu.memory_space<vmem>>, %arg2: memref<8x32xf32, #tpu.memory_space<vmem>>) attributes {dimension_semantics = [#tpu.dimension_semantics<parallel>], iteration_bounds = array<i64: 1>, scalar_prefetch = 0 : i64, scratch_operands = 0 : i64, tpu.core_type = #tpu.core_type<tc>, window_params = [{transform_indices = @transform_0, window_bounds = array<i64: 8, 32>}, {transform_indices = @transform_1, window_bounds = array<i64: 8, 32>}]} {
    %c0 = arith.constant 0 : index
    %c0_0 = arith.constant 0 : index
    %0 = vector.load %arg1[%c0, %c0_0] : memref<8x32xf32, #tpu.memory_space<vmem>>, vector<8x32xf32>
    %1 = arith.mulf %0, %0 : vector<8x32xf32>
    %cst = arith.constant dense<0.000000e+00> : vector<8xf32>
    %2 = vector.multi_reduction <add>, %1, %cst [1] : vector<8x32xf32> to vector<8xf32>
    %3 = vector.shape_cast %2 : vector<8xf32> to vector<8x1xf32>
    %cst_1 = arith.constant 1.000000e-24 : f32
    %4 = vector.broadcast %cst_1 : f32 to vector<8x1xf32>
    %5 = arith.maximumf %3, %4 : vector<8x1xf32>
    %6 = math.rsqrt %5 : vector<8x1xf32>
    %7 = vector.broadcast %6 : vector<8x1xf32> to vector<8x32xf32>
    %8 = arith.mulf %0, %7 : vector<8x32xf32>
    %c0_2 = arith.constant 0 : index
    %c0_3 = arith.constant 0 : index
    %9 = vector.load %arg2[%c0_2, %c0_3] : memref<8x32xf32, #tpu.memory_space<vmem>>, vector<8x32xf32>
    tpu.vector_store %arg2[%c0_2, %c0_3], %8 {strides = array<i32>} : memref<8x32xf32, #tpu.memory_space<vmem>>, vector<8x32xf32>,
    return
  }
  func.func @transform_0(%arg0: i32) -> (i32, i32) {
    %c0_i32 = arith.constant 0 : i32
    %c0_i32_0 = arith.constant 0 : i32
    return %arg0, %c0_i32 : i32, i32
  }
  func.func @transform_1(%arg0: i32) -> (i32, i32) {
    %c0_i32 = arith.constant 0 : i32
    %c0_i32_0 = arith.constant 0 : i32
    return %arg0, %c0_i32 : i32, i32
  }
}

</mosaic_0001>

<llo_original>
// kernel: tpu_custom_call.1
$region0: #{tpu_custom_call.1}
  #allocation0 [shape = 'u32[]', space=smem, size = 0x4, offset = 0x4, fixed_abs, tag = 'smem constant byte address 0x4 - core index']
  #allocation1 [shape = 'u32[144,128]{1,0:T(1,128)}', space=vmem, size = 0x12000, scoped, tag = 'internal scratch']
  %s0 = inlined_call_operand.hbm [shape: f32[8,32], index: 0, kind: input, shape index: {}]
  %s1 = inlined_call_operand.hbm [shape: f32[8,32], index: 1, kind: output, shape index: {}]
  %s2 = sld [smem:[#allocation0]]
  $region18: #{tpu_custom_call.1} parent=0
    _
  %s4 = ssub.s32 1, %s2
  %s5 = scalar_select 0, %s4, %s2
  $region1: #{tpu_custom_call.1} parent=0
    #allocation2 [shape = 'u8[4096]{0}', space=vmem, size = 0x1000, scoped, tag = 'input window, operand 0, single buffered']
    #allocation3 [shape = 's32[1]{0}', space=sflag, size = 0x4, scoped, tag = 'scoped memory for tpu_custom_call.1']
    #allocation4 [shape = 's32[1]{0}', space=sflag, size = 0x4, scoped, tag = 'scoped memory for tpu_custom_call.1']
    #allocation5 [shape = 'u8[4096]{0}', space=vmem, size = 0x1000, scoped, tag = 'output window, operand 0, single buffered']
    %6 = vsyncpa [#allocation3], 0
    %7 = vsyncpa [#allocation4], 0
    // Predicated region
    $region2: #{tpu_custom_call.1} parent=1 // pred_check
      _
    $region3: #{tpu_custom_call.1} parent=1 // pred_check_branch
      %9 = sbr.rel (0) target = $region5
    $region4: #{tpu_custom_call.1} parent=1 // pred_region
      %s11 = ssub.s32 128, 128
      %12 = vsyncadd [#allocation3], %s11
      %s14 = sshll.u32 [#allocation2], 4
      %s15 = int_to_ptr.vmem [resolvable:$true] %s14
      %17 = dma.hbm_to_vmem [thread:$0]  %s0, 128, %s15, [#allocation3]
    $region5: #{tpu_custom_call.1} parent=1 // pred_fallthru
      _
    // Predicated region
    $region6: #{tpu_custom_call.1} parent=1 // pred_check
      _
    $region7: #{tpu_custom_call.1} parent=1 // pred_check_branch
      %19 = sbr.rel (0) target = $region9
    $region8: #{tpu_custom_call.1} parent=1 // pred_region
      %20 = dma.done [#allocation3], 128
    $region9: #{tpu_custom_call.1} parent=1 // pred_fallthru
      _
    %v21 = vld [vmem:[#allocation2] sm:$0xff]
    %v22 = vmul.f32 %v21, %v21
    %vm23 = vcmask 261120
    %v24 = vsel %vm23, %v22, 0.0
    %25 = vadd.xlane.f32.xlu0 %v24
    %v26 = vpop.xlane.xlu0 %25
    %v27 = vmax.f32 %v26, 1e-24
    %v28 = vrsqrt.pop %v27
    %v29 = vmul.f32 %v21, %v28
    %30 = vst.msk [vmem:[#allocation5] sm:$0xff] %vm23, %v29
    // Predicated region
    $region10: #{tpu_custom_call.1} parent=1 // pred_check
      _
    $region11: #{tpu_custom_call.1} parent=1 // pred_check_branch
      %32 = sbr.rel (0) target = $region13
    $region12: #{tpu_custom_call.1} parent=1 // pred_region
      %s34 = ssub.s32 128, 128
      %35 = vsyncadd [#allocation4], %s34
      %s37 = sshll.u32 [#allocation5], 4
      %s38 = int_to_ptr.vmem [resolvable:$true] %s37
      %40 = dma.vmem_to_hbm [thread:$0]  %s38, 128, %s1, [#allocation4]
    $region13: #{tpu_custom_call.1} parent=1 // pred_fallthru
      _
    // Predicated region
    $region14: #{tpu_custom_call.1} parent=1 // pred_check
      _
    $region15: #{tpu_custom_call.1} parent=1 // pred_check_branch
      %42 = sbr.rel (0) target = $region17
    $region16: #{tpu_custom_call.1} parent=1 // pred_region
      %43 = dma.done [#allocation4], 128
    $region17: #{tpu_custom_call.1} parent=1 // pred_fallthru
      _
    %44 = vsyncpa [#allocation3], 1
    %45 = vsyncpa [#allocation4], 1

</llo_original>
